<compile_context>
chip_gen: v5e
topology: v5e:2x2
jax: 0.10.0
libtpu: 0.0.40
codegen_flags: <defaults>
</compile_context>

<pallas_src>
import functools

import jax
import jax.numpy as jnp
from jax.experimental import pallas as pl
from jax.experimental.pallas import tpu as pltpu


_DEFAULT_BLOCK_BYTES = 2 * 1024 * 1024     # ~2 MiB per slab block
_DEFAULT_LANE_CAP = 4096                   # lane-tile cap (multiple of 128)
_VMEM_LIMIT = 32 * 1024 * 1024             # explicit scoped-VMEM limit (safe on v5e/v6e/v7x)


# ---------------------------------------------------------------------------
# Tiling helpers
# ---------------------------------------------------------------------------
def _round_up(x, m):
    return ((x + m - 1) // m) * m


def _largest_divisor_tile(total, align, cap):
    """Largest multiple of `align` that divides `total` and is <= cap."""
    cap = max(align, min(cap, total))
    best = align
    t = align
    while t <= cap:
        if total % t == 0:
            best = t
        t += align
    return best


def _pick_lane_tile(hw, cap):
    """Pick the lane (H*W) tile.  Returns (lane_tile, ragged)."""
    if hw <= cap:
        return hw, False                           # full extent: always legal
    if hw % 128 == 0:
        best = _largest_divisor_tile(hw, 128, cap)
        if best * 2 >= cap:                        # good (non-tiny) divisor
            return best, False
    return cap, True                               # ragged 128-multiple tile + mask


def _pick_row_tile(nc, cap):
    """Pick the row (N*C) tile (divisor of nc, multiple of 8, or full extent)."""
    if nc % 8 != 0:
        return nc
    return _largest_divisor_tile(nc, 8, cap)


# ---------------------------------------------------------------------------
# Pass 1: per-(n,c)-row reductions  sum(dy)  and  sum(dy * (x - mean))
# over the H*W lane dimension.  Grid axis 1 is the reduction axis; the (TM,1)
# output columns stay resident across it.  Ragged lane tails are masked.
# ---------------------------------------------------------------------------
def _bn_bwd_reduce_kernel(dy_ref, x_ref, mean_ref, sum_dy_ref, sum_dyxmu_ref,
                          *, hw, lane_tile, ragged):
    j = pl.program_id(1)

    @pl.when(j == 0)
    def _():
        sum_dy_ref[...] = jnp.zeros_like(sum_dy_ref)
        sum_dyxmu_ref[...] = jnp.zeros_like(sum_dyxmu_ref)

    dy = dy_ref[...].astype(jnp.float32)
    xmu = x_ref[...].astype(jnp.float32) - mean_ref[...]          # (TM,1) bcast
    dyxmu = dy * xmu
    if ragged:
        lane = jax.lax.broadcasted_iota(jnp.int32, dy.shape, 1)
        valid = (j * lane_tile + lane) < hw
        dy = jnp.where(valid, dy, 0.0)
        dyxmu = jnp.where(valid, dyxmu, 0.0)
    sum_dy_ref[...] += jnp.sum(dy, axis=1, keepdims=True)
    sum_dyxmu_ref[...] += jnp.sum(dyxmu, axis=1, keepdims=True)


# ---------------------------------------------------------------------------
# Pass 2 (train): elementwise grad_input with fused per-channel scalars packed
# into a single (NC, 3) array:   dx = dy * s - x * t + u
# ---------------------------------------------------------------------------
def _bn_bwd_dx_train_kernel(dy_ref, x_ref, stu_ref, dx_ref):
    dy = dy_ref[...].astype(jnp.float32)
    x = x_ref[...].astype(jnp.float32)
    stu = stu_ref[...]                              # (TM, 3) f32
    s = stu[:, 0:1]
    t = stu[:, 1:2]
    u = stu[:, 2:3]
    dx_ref[...] = (dy * s - x * t + u).astype(dx_ref.dtype)


# ---------------------------------------------------------------------------
# Pass 2 (eval): dx = dy * s   (no x / t / u traffic at all)
# ---------------------------------------------------------------------------
def _bn_bwd_dx_eval_kernel(dy_ref, s_ref, dx_ref):
    dy = dy_ref[...].astype(jnp.float32)
    dx_ref[...] = (dy * s_ref[...]).astype(dx_ref.dtype)


# ---------------------------------------------------------------------------
# Wrapper: aten.native_batch_norm_backward.default
# ---------------------------------------------------------------------------
def native_batch_norm_backward(grad_out, x, weight, running_mean, running_var,
                               save_mean, save_invstd, train, eps, output_mask,
                               *, block_bytes=_DEFAULT_BLOCK_BYTES,
                               lane_cap=_DEFAULT_LANE_CAP):
    N, C, H, W = x.shape
    NC = N * C
    HW = H * W
    M = N * HW

    # NCHW viewed as (N*C, H*W): pure reshape, no transpose, no dtype change.
    dy2 = grad_out.reshape(NC, HW)
    x2 = x.reshape(NC, HW)

    if train:
        mean = save_mean.astype(jnp.float32)
        invstd = save_invstd.astype(jnp.float32)
    else:
        mean = running_mean.astype(jnp.float32)
        invstd = 1.0 / jnp.sqrt(running_var.astype(jnp.float32) + eps)

    if weight is None:
        w = jnp.ones((C,), jnp.float32)
        wb_dtype = grad_out.dtype
    else:
        w = weight.astype(jnp.float32)
        wb_dtype = weight.dtype

    # ---- tile selection (lane dim = H*W, sublane dim = N*C rows) ------------
    dy_isz = jnp.dtype(grad_out.dtype).itemsize
    x_isz = jnp.dtype(x.dtype).itemsize
    itemsize = max(dy_isz, x_isz)
    elem_cap = max(128, block_bytes // itemsize)        # elems per slab block

    T_HW, ragged = _pick_lane_tile(HW, lane_cap)
    tm_cap = max(8, elem_cap // max(T_HW, 1))
    if NC >= 16:
        # keep >= 2 row blocks so both v7x TensorCores work in pass 1
        tm_cap = min(tm_cap, _round_up(max(NC // 2, 8), 8))
    TM = _pick_row_tile(NC, tm_cap)

    nr = NC // TM                     # TM divides NC by construction
    nl = pl.cdiv(HW, T_HW)            # ragged tail allowed (masked)

    slab_spec = pl.BlockSpec((TM, T_HW), lambda i, j: (i, j))
    rowv_spec = pl.BlockSpec((TM, 1), lambda i, j: (i, 0))

    def rows(v):
        # (C,) per-channel vector -> (N*C, 1) per-row column (row r = n*C + c).
        return jnp.broadcast_to(v.astype(jnp.float32)[None, :], (N, C)).reshape(NC, 1)

    need_sums = bool(output_mask[1]) or bool(output_mask[2]) or \
                (train and bool(output_mask[0]))

    sum_dy = sum_dy_xmu = None
    if need_sums:
        reduce_kernel = functools.partial(
            _bn_bwd_reduce_kernel, hw=HW, lane_tile=T_HW, ragged=ragged)
        reduce_cost = pl.CostEstimate(
            flops=3 * NC * HW,
            transcendentals=0,
            bytes_accessed=NC * HW * (dy_isz + x_isz) + NC * 4 * 3)
        row_dy, row_dyxmu = pl.pallas_call(
            reduce_kernel,
            out_shape=(jax.ShapeDtypeStruct((NC, 1), jnp.float32),
                       jax.ShapeDtypeStruct((NC, 1), jnp.float32)),
            grid=(nr, nl),
            in_specs=[slab_spec, slab_spec, rowv_spec],
            out_specs=(rowv_spec, rowv_spec),
            compiler_params=pltpu.CompilerParams(
                dimension_semantics=("parallel", "arbitrary"),
                vmem_limit_bytes=_VMEM_LIMIT),
            cost_estimate=reduce_cost,
        )(dy2, x2, rows(mean))
        # Tiny (N, C) finishing reduction over the batch rows.
        sum_dy = row_dy.reshape(N, C).sum(axis=0)
        sum_dy_xmu = row_dyxmu.reshape(N, C).sum(axis=0)

    grad_input = grad_weight = grad_bias = None
    if output_mask[2]:
        grad_bias = sum_dy.astype(wb_dtype)
    if output_mask[1]:
        grad_weight = (sum_dy_xmu * invstd).astype(wb_dtype)

    if output_mask[0]:
        s = invstd * w
        if train:
            # Fused per-channel scalars:  dx = dy*s - x*t + u
            t = s * (invstd * invstd) * (sum_dy_xmu / M)
            u = mean * t - s * (sum_dy / M)
            stu = jnp.concatenate([rows(s), rows(t), rows(u)], axis=1)   # (NC, 3)
            dx_cost = pl.CostEstimate(
                flops=3 * NC * HW,
                transcendentals=0,
                bytes_accessed=NC * HW * (dy_isz + 2 * x_isz) + NC * 4 * 3)
            dx2 = pl.pallas_call(
                _bn_bwd_dx_train_kernel,
                out_shape=jax.ShapeDtypeStruct((NC, HW), x.dtype),
                grid=(nr, nl),
                in_specs=[slab_spec, slab_spec,
                          pl.BlockSpec((TM, 3), lambda i, j: (i, 0))],
                out_specs=slab_spec,
                compiler_params=pltpu.CompilerParams(
                    dimension_semantics=("parallel", "parallel"),
                    vmem_limit_bytes=_VMEM_LIMIT),
                cost_estimate=dx_cost,
            )(dy2, x2, stu)
        else:
            # Eval mode: dx = dy * s — specialized kernel, no x/t/u traffic.
            dx_cost = pl.CostEstimate(
                flops=NC * HW,
                transcendentals=0,
                bytes_accessed=NC * HW * (dy_isz + x_isz) + NC * 4)
            dx2 = pl.pallas_call(
                _bn_bwd_dx_eval_kernel,
                out_shape=jax.ShapeDtypeStruct((NC, HW), x.dtype),
                grid=(nr, nl),
                in_specs=[slab_spec, rowv_spec],
                out_specs=slab_spec,
                compiler_params=pltpu.CompilerParams(
                    dimension_semantics=("parallel", "parallel"),
                    vmem_limit_bytes=_VMEM_LIMIT),
                cost_estimate=dx_cost,
            )(dy2, rows(s))
        grad_input = dx2.reshape(N, C, H, W)

    return grad_input, grad_weight, grad_bias


# ---------------------------------------------------------------------------
# Pure-JAX references for correctness checks.
# ---------------------------------------------------------------------------
def _reference_train(dy, x, w, mean, invstd):
    M = dy.shape[0] * dy.shape[2] * dy.shape[3]
    xmu = x - mean[None, :, None, None]
    sum_dy = dy.sum(axis=(0, 2, 3))
    sum_dy_xmu = (dy * xmu).sum(axis=(0, 2, 3))
    gw = sum_dy_xmu * invstd
    gb = sum_dy
    dx = (dy
          - (sum_dy / M)[None, :, None, None]
          - xmu * ((invstd ** 2) * sum_dy_xmu / M)[None, :, None, None]
          ) * (invstd * w)[None, :, None, None]
    return dx, gw, gb


def _reference_eval(dy, x, w, running_mean, running_var, eps):
    invstd = 1.0 / jnp.sqrt(running_var + eps)
    xmu = x - running_mean[None, :, None, None]
    gb = dy.sum(axis=(0, 2, 3))
    gw = (dy * xmu).sum(axis=(0, 2, 3)) * invstd
    dx = dy * (invstd * w)[None, :, None, None]
    return dx, gw, gb


if __name__ == "__main__":
    key = jax.random.PRNGKey(0)
    k1, k2, k3, k4, k5, k6, k7, k8 = jax.random.split(key, 8)

    eps = 1e-5

    # ---------------- case 1: train mode, f32, aligned HW (16x16) -----------
    N, C, H, W = 2, 4, 16, 16
    x = jax.random.normal(k1, (N, C, H, W), dtype=jnp.float32)
    grad_out = jax.random.normal(k2, (N, C, H, W), dtype=jnp.float32)
    weight = jax.random.normal(k3, (C,), dtype=jnp.float32) * 0.1 + 1.0
    save_mean = x.mean(axis=(0, 2, 3))
    save_var = x.var(axis=(0, 2, 3))                    # biased variance
    save_invstd = 1.0 / jnp.sqrt(save_var + eps)
    running_mean = jax.random.normal(k4, (C,), jnp.float32) * 0.1
    running_var = jnp.abs(jax.random.normal(k5, (C,), jnp.float32)) * 0.5 + 0.5

    gi, gw, gb = native_batch_norm_backward(
        grad_out, x, weight, running_mean, running_var,
        save_mean, save_invstd, True, eps, (True, True, True))
    jax.block_until_ready((gi, gw, gb))
    r_dx, r_gw, r_gb = _reference_train(grad_out, x, weight, save_mean, save_invstd)
    assert jnp.allclose(gi, r_dx, atol=1e-4, rtol=1e-4)
    assert jnp.allclose(gw, r_gw, atol=1e-4, rtol=1e-4)
    assert jnp.allclose(gb, r_gb, atol=1e-4, rtol=1e-4)

    # ---------------- case 2: eval mode (specialized dy*s kernel), f32 ------
    gi, gw, gb = native_batch_norm_backward(
        grad_out, x, weight, running_mean, running_var,
        save_mean, save_invstd, False, eps, (True, True, True))
    jax.block_until_ready((gi, gw, gb))
    e_dx, e_gw, e_gb = _reference_eval(grad_out, x, weight, running_mean, running_var, eps)
    assert jnp.allclose(gi, e_dx, atol=1e-4, rtol=1e-4)
    assert jnp.allclose(gw, e_gw, atol=1e-4, rtol=1e-4)
    assert jnp.allclose(gb, e_gb, atol=1e-4, rtol=1e-4)

    # ---------------- case 3: train mode, bf16 activations ------------------
    x16 = x.astype(jnp.bfloat16)
    dy16 = grad_out.astype(jnp.bfloat16)
    gi, gw, gb = native_batch_norm_backward(
        dy16, x16, weight, running_mean, running_var,
        save_mean, save_invstd, True, eps, (True, True, True))
    jax.block_until_ready((gi, gw, gb))
    b_dx, b_gw, b_gb = _reference_train(dy16.astype(jnp.float32),
                                        x16.astype(jnp.float32),
                                        weight, save_mean, save_invstd)
    assert jnp.allclose(gi.astype(jnp.float32), b_dx, atol=3e-2, rtol=3e-2)
    assert jnp.allclose(gw, b_gw, atol=1e-3, rtol=1e-3)
    assert jnp.allclose(gb, b_gb, atol=1e-3, rtol=1e-3)

    # ---------------- case 4: ragged lane tiling (HW=144, lane_cap=128) -----
    N2, C2, H2, W2 = 2, 8, 12, 12
    x_r = jax.random.normal(k6, (N2, C2, H2, W2), dtype=jnp.float32)
    dy_r = jax.random.normal(k7, (N2, C2, H2, W2), dtype=jnp.float32)
    w_r = jax.random.normal(k8, (C2,), dtype=jnp.float32) * 0.1 + 1.0
    sm_r = x_r.mean(axis=(0, 2, 3))
    sv_r = x_r.var(axis=(0, 2, 3))
    si_r = 1.0 / jnp.sqrt(sv_r + eps)
    rm_r = jnp.zeros((C2,), jnp.float32)
    rv_r = jnp.ones((C2,), jnp.float32)

    gi, gw, gb = native_batch_norm_backward(
        dy_r, x_r, w_r, rm_r, rv_r, sm_r, si_r, True, eps, (True, True, True),
        lane_cap=128)                       # force masked ragged lane tiles
    jax.block_until_ready((gi, gw, gb))
    r_dx, r_gw, r_gb = _reference_train(dy_r, x_r, w_r, sm_r, si_r)
    assert jnp.allclose(gi, r_dx, atol=1e-4, rtol=1e-4)
    assert jnp.allclose(gw, r_gw, atol=1e-4, rtol=1e-4)
    assert jnp.allclose(gb, r_gb, atol=1e-4, rtol=1e-4)

    gi, gw, gb = native_batch_norm_backward(
        dy_r, x_r, w_r, rm_r, rv_r, sm_r, si_r, False, eps, (True, True, True),
        lane_cap=128)
    jax.block_until_ready((gi, gw, gb))
    e_dx, e_gw, e_gb = _reference_eval(dy_r, x_r, w_r, rm_r, rv_r, eps)
    assert jnp.allclose(gi, e_dx, atol=1e-4, rtol=1e-4)
    assert jnp.allclose(gw, e_gw, atol=1e-4, rtol=1e-4)
    assert jnp.allclose(gb, e_gb, atol=1e-4, rtol=1e-4)

    print("KERNEL_OK")
</pallas_src>

<mosaic_0001>
module attributes {stable_mosaic.version = 11 : i64} {
  func.func @_bn_bwd_reduce_kernel(%arg0: i32, %arg1: i32, %arg2: memref<8x256xf32, #tpu.memory_space<vmem>>, %arg3: memref<8x256xf32, #tpu.memory_space<vmem>>, %arg4: memref<8x1xf32, #tpu.memory_space<vmem>>, %arg5: memref<8x1xf32, #tpu.memory_space<vmem>>, %arg6: memref<8x1xf32, #tpu.memory_space<vmem>>) attributes {dimension_semantics = [#tpu.dimension_semantics<parallel>, #tpu.dimension_semantics<arbitrary>], iteration_bounds = array<i64: 1, 1>, scalar_prefetch = 0 : i64, scratch_operands = 0 : i64, tpu.core_type = #tpu.core_type<tc>, window_params = [{transform_indices = @transform_0, window_bounds = array<i64: 8, 256>}, {transform_indices = @transform_1, window_bounds = array<i64: 8, 256>}, {transform_indices = @transform_2, window_bounds = array<i64: 8, 1>}, {transform_indices = @transform_3, window_bounds = array<i64: 8, 1>}, {transform_indices = @transform_4, window_bounds = array<i64: 8, 1>}]} {
    %c0_i32 = arith.constant 0 : i32
    %0 = arith.cmpi eq, %arg1, %c0_i32 : i32
    %1 = arith.extui %0 : i1 to i32
    %c0_i32_0 = arith.constant 0 : i32
    %2 = arith.cmpi ne, %1, %c0_i32_0 : i32
    scf.if %2 {
      %cst_15 = arith.constant 0.000000e+00 : f32
      %19 = vector.broadcast %cst_15 : f32 to vector<8x1xf32>
      %c0_16 = arith.constant 0 : index
      %c0_17 = arith.constant 0 : index
      %20 = vector.load %arg5[%c0_16, %c0_17] : memref<8x1xf32, #tpu.memory_space<vmem>>, vector<8x1xf32>
      tpu.vector_store %arg5[%c0_16, %c0_17], %19 {strides = array<i32>} : memref<8x1xf32, #tpu.memory_space<vmem>>, vector<8x1xf32>,
      %cst_18 = arith.constant 0.000000e+00 : f32
      %21 = vector.broadcast %cst_18 : f32 to vector<8x1xf32>
      %c0_19 = arith.constant 0 : index
      %c0_20 = arith.constant 0 : index
      %22 = vector.load %arg6[%c0_19, %c0_20] : memref<8x1xf32, #tpu.memory_space<vmem>>, vector<8x1xf32>
      tpu.vector_store %arg6[%c0_19, %c0_20], %21 {strides = array<i32>} : memref<8x1xf32, #tpu.memory_space<vmem>>, vector<8x1xf32>,
    } else {
    }
    %c0 = arith.constant 0 : index
    %c0_1 = arith.constant 0 : index
    %3 = vector.load %arg2[%c0, %c0_1] : memref<8x256xf32, #tpu.memory_space<vmem>>, vector<8x256xf32>
    %c0_2 = arith.constant 0 : index
    %c0_3 = arith.constant 0 : index
    %4 = vector.load %arg3[%c0_2, %c0_3] : memref<8x256xf32, #tpu.memory_space<vmem>>, vector<8x256xf32>
    %c0_4 = arith.constant 0 : index
    %c0_5 = arith.constant 0 : index
    %5 = vector.load %arg4[%c0_4, %c0_5] : memref<8x1xf32, #tpu.memory_space<vmem>>, vector<8x1xf32>
    %6 = vector.broadcast %5 : vector<8x1xf32> to vector<8x256xf32>
    %7 = arith.subf %4, %6 : vector<8x256xf32>
    %8 = arith.mulf %3, %7 : vector<8x256xf32>
    %c0_6 = arith.constant 0 : index
    %c0_7 = arith.constant 0 : index
    %9 = vector.load %arg5[%c0_6, %c0_7] : memref<8x1xf32, #tpu.memory_space<vmem>>, vector<8x1xf32>
    %cst = arith.constant dense<0.000000e+00> : vector<8xf32>
    %10 = vector.multi_reduction <add>, %3, %cst [1] : vector<8x256xf32> to vector<8xf32>
    %11 = vector.shape_cast %10 : vector<8xf32> to vector<8x1xf32>
    %12 = arith.addf %9, %11 : vector<8x1xf32>
    %c0_8 = arith.constant 0 : index
    %c0_9 = arith.constant 0 : index
    %13 = vector.load %arg5[%c0_8, %c0_9] : memref<8x1xf32, #tpu.memory_space<vmem>>, vector<8x1xf32>
    tpu.vector_store %arg5[%c0_8, %c0_9], %12 {strides = array<i32>} : memref<8x1xf32, #tpu.memory_space<vmem>>, vector<8x1xf32>,
    %c0_10 = arith.constant 0 : index
    %c0_11 = arith.constant 0 : index
    %14 = vector.load %arg6[%c0_10, %c0_11] : memref<8x1xf32, #tpu.memory_space<vmem>>, vector<8x1xf32>
    %cst_12 = arith.constant dense<0.000000e+00> : vector<8xf32>
    %15 = vector.multi_reduction <add>, %8, %cst_12 [1] : vector<8x256xf32> to vector<8xf32>
    %16 = vector.shape_cast %15 : vector<8xf32> to vector<8x1xf32>
    %17 = arith.addf %14, %16 : vector<8x1xf32>
    %c0_13 = arith.constant 0 : index
    %c0_14 = arith.constant 0 : index
    %18 = vector.load %arg6[%c0_13, %c0_14] : memref<8x1xf32, #tpu.memory_space<vmem>>, vector<8x1xf32>
    tpu.vector_store %arg6[%c0_13, %c0_14], %17 {strides = array<i32>} : memref<8x1xf32, #tpu.memory_space<vmem>>, vector<8x1xf32>,
    return
  }
  func.func @transform_0(%arg0: i32, %arg1: i32) -> (i32, i32) {
    %c0_i32 = arith.constant 0 : i32
    return %arg0, %arg1 : i32, i32
  }
  func.func @transform_1(%arg0: i32, %arg1: i32) -> (i32, i32) {
    %c0_i32 = arith.constant 0 : i32
    return %arg0, %arg1 : i32, i32
  }
  func.func @transform_2(%arg0: i32, %arg1: i32) -> (i32, i32) {
    %c0_i32 = arith.constant 0 : i32
    %c0_i32_0 = arith.constant 0 : i32
    return %arg0, %c0_i32 : i32, i32
  }
  func.func @transform_3(%arg0: i32, %arg1: i32) -> (i32, i32) {
    %c0_i32 = arith.constant 0 : i32
    %c0_i32_0 = arith.constant 0 : i32
    return %arg0, %c0_i32 : i32, i32
  }
  func.func @transform_4(%arg0: i32, %arg1: i32) -> (i32, i32) {
    %c0_i32 = arith.constant 0 : i32
    %c0_i32_0 = arith.constant 0 : i32
    return %arg0, %c0_i32 : i32, i32
  }
}

</mosaic_0001>

<llo_original>
// kernel: tpu_custom_call.1
$region0: #{tpu_custom_call.1}
  #allocation0 [shape = 'u32[]', space=smem, size = 0x4, offset = 0x4, fixed_abs, tag = 'smem constant byte address 0x4 - core index']
  #allocation1 [shape = 'u32[72,128]{1,0:T(1,128)}', space=vmem, size = 0x9000, scoped, tag = 'internal scratch']
  %s0 = inlined_call_operand.hbm [shape: f32[8,256], index: 0, kind: input, shape index: {}]
  %s1 = inlined_call_operand.hbm [shape: f32[8,256], index: 1, kind: input, shape index: {}]
  %s2 = inlined_call_operand.vmem [shape: f32[8,1], index: 2, kind: input, shape index: {}]
  %s3 = inlined_call_operand.vmem [shape: f32[8,1], index: 3, kind: output, shape index: {0}]
  %s4 = inlined_call_operand.vmem [shape: f32[8,1], index: 4, kind: output, shape index: {1}]
  %5 = xla_tuple %s3, %s4
  %s6 = sld [smem:[#allocation0]]
  $region42: #{tpu_custom_call.1} parent=0
    _
  %s8 = ssub.s32 1, %s6
  %s9 = scalar_select 0, %s8, %s6
  $region1: #{tpu_custom_call.1} parent=0
    #allocation2 [shape = 'u8[8192]{0}', space=vmem, size = 0x2000, scoped, tag = 'input window, operand 0, single buffered']
    #allocation3 [shape = 's32[1]{0}', space=sflag, size = 0x4, scoped, tag = 'scoped memory for tpu_custom_call.1']
    #allocation4 [shape = 'u8[8192]{0}', space=vmem, size = 0x2000, scoped, tag = 'input window, operand 1, single buffered']
    #allocation5 [shape = 's32[1]{0}', space=sflag, size = 0x4, scoped, tag = 'scoped memory for tpu_custom_call.1']
    %10 = vsyncpa [#allocation3], 0
    %11 = vsyncpa [#allocation5], 0
    // Predicated region
    $region2: #{tpu_custom_call.1} parent=1 // pred_check
      _
    $region3: #{tpu_custom_call.1} parent=1 // pred_check_branch
      %13 = sbr.rel (0) target = $region5
    $region4: #{tpu_custom_call.1} parent=1 // pred_region
      %15 = vsyncadd [#allocation3], 0
      %s17 = sshll.u32 %s0, 4
      %s18 = int_to_ptr.hbm [resolvable:$true] %s17
      %s19 = sshll.u32 [#allocation2], 4
      %s20 = int_to_ptr.vmem [resolvable:$true] %s19
      %22 = dma.hbm_to_vmem [thread:$0]  %s18, 256, %s20, [#allocation3]
    $region5: #{tpu_custom_call.1} parent=1 // pred_fallthru
      _
    // Predicated region
    $region6: #{tpu_custom_call.1} parent=1 // pred_check
      _
    $region7: #{tpu_custom_call.1} parent=1 // pred_check_branch
      %24 = sbr.rel (0) target = $region9
    $region8: #{tpu_custom_call.1} parent=1 // pred_region
      %26 = vsyncadd [#allocation5], 0
      %s28 = sshll.u32 %s1, 4
      %s29 = int_to_ptr.hbm [resolvable:$true] %s28
      %s30 = sshll.u32 [#allocation4], 4
      %s31 = int_to_ptr.vmem [resolvable:$true] %s30
      %33 = dma.hbm_to_vmem [thread:$0]  %s29, 256, %s31, [#allocation5]
    $region9: #{tpu_custom_call.1} parent=1 // pred_fallthru
      _
    // Predicated region
    $region10: #{tpu_custom_call.1} parent=1 // pred_check
      _
    $region11: #{tpu_custom_call.1} parent=1 // pred_check_branch
      %35 = sbr.rel (0) target = $region13
    $region12: #{tpu_custom_call.1} parent=1 // pred_region
      _
    $region13: #{tpu_custom_call.1} parent=1 // pred_fallthru
      _
    // Predicated region
    $region14: #{tpu_custom_call.1} parent=1 // pred_check
      _
    $region15: #{tpu_custom_call.1} parent=1 // pred_check_branch
      %37 = sbr.rel (0) target = $region17
    $region16: #{tpu_custom_call.1} parent=1 // pred_region
      %39 = dma.done [#allocation3], 256
    $region17: #{tpu_custom_call.1} parent=1 // pred_fallthru
      _
    // Predicated region
    $region18: #{tpu_custom_call.1} parent=1 // pred_check
      _
    $region19: #{tpu_custom_call.1} parent=1 // pred_check_branch
      %41 = sbr.rel (0) target = $region21
    $region20: #{tpu_custom_call.1} parent=1 // pred_region
      %43 = dma.done [#allocation5], 256
    $region21: #{tpu_custom_call.1} parent=1 // pred_fallthru
      _
    %p44 = scmp.eq.s32.totalorder 0, 0
    // Predicated region
    $region22: #{tpu_custom_call.1} parent=1 // pred_check
      %p45 = pneg %p44
    $region23: #{tpu_custom_call.1} parent=1 // pred_check_branch
      %47 = sbr.rel (%p45) target = $region25
    $region24: #{tpu_custom_call.1} parent=1 // pred_region
      %vm48 = vcmask 7168
      %49 = vst.msk [vmem:[%s3] sm:$0xff] %vm48, 0.0
      %50 = vst.msk [vmem:[%s4] sm:$0xff] %vm48, 0.0
    $region25: #{tpu_custom_call.1} parent=1 // pred_fallthru
      _
    %v51 = vld [vmem:[#allocation2] sm:$0xff]
    %v52 = vld [vmem:[#allocation2 + $0x8] sm:$0xff]
    %v53 = vld [vmem:[#allocation4] sm:$0xff]
    %v54 = vld [vmem:[#allocation4 + $0x8] sm:$0xff]
    %v55 = vld [vmem:[%s2] sm:$0xff]
    %57 = vset.pattern.permute.xlu0 0
    %58 = vperm.xlu0 %57, %v55
    %v59 = vpop.permute.xlu0 %58
    %v61 = vsub.f32 %v53, %v59
    %v62 = vsub.f32 %v54, %v59
    %v63 = vmul.f32 %v51, %v61
    %v64 = vmul.f32 %v52, %v62
    %v65 = vld [vmem:[%s3] sm:$0xff]
    %v66 = vadd.f32 %v51, %v52
    %67 = vadd.xlane.f32.xlu0 %v66
    %v68 = vpop.xlane.xlu0 %67
    %v69 = vadd.f32 %v65, %v68
    %vm70 = vcmask 7168
    %71 = vst.msk [vmem:[%s3] sm:$0xff] %vm70, %v69
    %v72 = vld [vmem:[%s4] sm:$0xff]
    %v73 = vadd.f32 %v63, %v64
    %74 = vadd.xlane.f32.xlu0 %v73
    %v75 = vpop.xlane.xlu0 %74
    %v76 = vadd.f32 %v72, %v75
    %77 = vst.msk [vmem:[%s4] sm:$0xff] %vm70, %v76
    // Predicated region
    $region26: #{tpu_custom_call.1} parent=1 // pred_check
      _
    $region27: #{tpu_custom_call.1} parent=1 // pred_check_branch
      %79 = sbr.rel (0) target = $region29
    $region28: #{tpu_custom_call.1} parent=1 // pred_region
      _
    $region29: #{tpu_custom_call.1} parent=1 // pred_fallthru
      _
    // Predicated region
    $region30: #{tpu_custom_call.1} parent=1 // pred_check
      _
    $region31: #{tpu_custom_call.1} parent=1 // pred_check_branch
      %81 = sbr.rel (0) target = $region33
    $region32: #{tpu_custom_call.1} parent=1 // pred_region
      _
    $region33: #{tpu_custom_call.1} parent=1 // pred_fallthru
      _
    // Predicated region
    $region34: #{tpu_custom_call.1} parent=1 // pred_check
      _
    $region35: #{tpu_custom_call.1} parent=1 // pred_check_branch
      %83 = sbr.rel (0) target = $region37
    $region36: #{tpu_custom_call.1} parent=1 // pred_region
      _
    $region37: #{tpu_custom_call.1} parent=1 // pred_fallthru
      _
    // Predicated region
    $region38: #{tpu_custom_call.1} parent=1 // pred_check
      _
    $region39: #{tpu_custom_call.1} parent=1 // pred_check_branch
      %85 = sbr.rel (0) target = $region41
    $region40: #{tpu_custom_call.1} parent=1 // pred_region
      _
    $region41: #{tpu_custom_call.1} parent=1 // pred_fallthru
      _
    %86 = vsyncpa [#allocation3], 1
    %87 = vsyncpa [#allocation5], 1

</llo_original>
